<compile_context>
chip_gen: v5e
topology: v5e:2x2
jax: 0.10.0
libtpu: 0.0.40
codegen_flags: <defaults>
</compile_context>

<pallas_src>
import math

import jax
import jax.numpy as jnp
from jax.experimental import pallas as pl
from jax.experimental.pallas import tpu as pltpu


# ----------------------------------------------------------------------------
# Kernels
# ----------------------------------------------------------------------------
def _make_kernel(hidden_tiled, use_scratch_acc, gelu_approx):
    """Build the kernel body for the chosen accumulation strategy."""

    def _gelu(h):
        if gelu_approx:
            # tanh formulation -> EUP slot, nearly free under the matmuls.
            return jax.nn.gelu(h, approximate=True)
        # Exact GELU, matches torch.nn.GELU default numerics.
        return 0.5 * h * (1.0 + jax.lax.erf(h * (1.0 / math.sqrt(2.0))))

    def _fc1_gelu(x_ref, w1_ref, b1_ref):
        h = jnp.dot(x_ref[...], w1_ref[...], preferred_element_type=jnp.float32)
        return _gelu(h + b1_ref[...].astype(jnp.float32))

    if not hidden_tiled:
        # Single hidden block: no reduction axis, no accumulator needed.
        def kernel(x_ref, w1_ref, b1_ref, w2_ref, b2_ref, o_ref):
            h = _fc1_gelu(x_ref, w1_ref, b1_ref)
            out = jnp.dot(h.astype(w2_ref.dtype), w2_ref[...],
                          preferred_element_type=jnp.float32)
            o_ref[...] = (out + b2_ref[...].astype(jnp.float32)).astype(o_ref.dtype)
        return kernel

    if use_scratch_acc:
        # Hidden reduction with a separate f32 VMEM accumulator (non-f32 output).
        def kernel(x_ref, w1_ref, b1_ref, w2_ref, b2_ref, o_ref, acc_ref):
            k = pl.program_id(1)
            nk = pl.num_programs(1)
            h = _fc1_gelu(x_ref, w1_ref, b1_ref)
            part = jnp.dot(h.astype(w2_ref.dtype), w2_ref[...],
                           preferred_element_type=jnp.float32)

            @pl.when(k == 0)
            def _():
                acc_ref[...] = b2_ref[...].astype(jnp.float32) + part

            @pl.when(k > 0)
            def _():
                acc_ref[...] += part

            @pl.when(k == nk - 1)
            def _():
                o_ref[...] = acc_ref[...].astype(o_ref.dtype)
        return kernel

    # Hidden reduction, f32 output: accumulate directly into the resident
    # output block (its block index is constant across k), no scratch.
    def kernel(x_ref, w1_ref, b1_ref, w2_ref, b2_ref, o_ref):
        k = pl.program_id(1)
        h = _fc1_gelu(x_ref, w1_ref, b1_ref)
        part = jnp.dot(h.astype(w2_ref.dtype), w2_ref[...],
                       preferred_element_type=jnp.float32)

        @pl.when(k == 0)
        def _():
            o_ref[...] = b2_ref[...].astype(jnp.float32) + part

        @pl.when(k > 0)
        def _():
            o_ref[...] += part
    return kernel


# ----------------------------------------------------------------------------
# Wrapper helpers
# ----------------------------------------------------------------------------
def _round_up(x, m):
    return ((x + m - 1) // m) * m


def _chip_info():
    """(vmem_capacity_bytes, default_scoped_vmem_bytes, tm_stream_target, two_cores)."""
    kind = ""
    try:
        kind = jax.devices()[0].device_kind.lower()
    except Exception:
        pass
    is_v5e = ("v5e" in kind) or ("v5 lite" in kind) or ("v5lite" in kind)
    is_v7 = "v7" in kind

    vmem_cap = None
    try:
        info = pltpu.get_tpu_info()
        cap = getattr(info, "vmem_capacity_bytes", None)
        if cap:
            vmem_cap = int(cap)
    except Exception:
        vmem_cap = None
    if vmem_cap is None:
        vmem_cap = (64 << 20) if is_v7 else (128 << 20)

    scoped_default = (16 << 20) if is_v5e else (32 << 20)

    # Row-tile target when weights are streamed per row tile (nk > 1):
    # arithmetic intensity per weight byte ~ tm FLOP/byte, needs to clear
    # peak_flops / HBM_BW (~240 v5e, ~650 v6e, ~320 v7x).
    if is_v5e:
        tm_stream = 256
    elif is_v7:
        tm_stream = 512
    else:  # v6e and unknown default
        tm_stream = 1024

    two_cores = is_v7
    return vmem_cap, scoped_default, tm_stream, two_cores


_BUFFERED_FALLBACK_ERRORS = (
    TypeError,
    NotImplementedError,
    getattr(pltpu, "LoweringException", TypeError),
)


# ----------------------------------------------------------------------------
# Public entry point
# ----------------------------------------------------------------------------
def mlp_pallas(x, w1, b1, w2, b2, *, tile_m=None, tile_h=None,
               vmem_limit_bytes=None, gelu_approx=False, compute_dtype=None):
    """x: (..., in_features); w1: (in, hidden); b1: (hidden,);
       w2: (hidden, out); b2: (out,).  Returns (..., out_features).

       compute_dtype: optionally cast operands (e.g. to bf16) while keeping f32
       MXU accumulation -- a numerics-visible 2-4x MXU-throughput choice."""
    if compute_dtype is not None:
        x, w1, b1, w2, b2 = (t.astype(compute_dtype) for t in (x, w1, b1, w2, b2))

    in_f, hidden = w1.shape
    out_f = w2.shape[1]
    assert x.shape[-1] == in_f
    assert w2.shape[0] == hidden

    orig_shape = x.shape
    x2d = x.reshape(-1, in_f)
    M = x2d.shape[0]
    out_dtype = x2d.dtype

    # Lane-dense output: pad W2/b2 columns to a multiple of 128 so the output
    # tile stores are unmasked full-lane `vst`s (biggest wrapper-level lever).
    out_p = max(128, _round_up(out_f, 128))
    if out_p != out_f:
        w2p = jnp.pad(w2, ((0, 0), (0, out_p - out_f)))
        b2p = jnp.pad(b2, (0, out_p - out_f))
    else:
        w2p, b2p = w2, b2

    x_isz = jnp.dtype(x2d.dtype).itemsize
    w_isz = jnp.dtype(w1.dtype).itemsize

    vmem_cap, scoped_default, tm_stream, two_cores = _chip_info()

    def vmem_est(tm_, th_, nk_):
        # Weight/bias slabs are single-buffered when grid-constant (nk == 1,
        # pl.Buffered(1)), double-buffered when streamed along k.
        wbuf = 1 if nk_ == 1 else 2
        acc_bytes = (tm_ * out_p * 4
                     if (nk_ > 1 and jnp.dtype(out_dtype) != jnp.dtype(jnp.float32))
                     else 0)
        return (2 * tm_ * in_f * x_isz                              # x tile (x2 buf)
                + wbuf * (in_f * th_ + th_ * out_p + th_ + out_p) * w_isz
                + 2 * tm_ * out_p * x_isz                           # out tile (x2 buf)
                + acc_bytes                                         # f32 accumulator
                + 2 * tm_ * th_ * 4)                                # f32 GELU slab + headroom

    # ---------------- choose (tm, th) ----------------
    tm = tile_m if tile_m is not None else 256
    tm = max(16, _round_up(min(tm, M), 16))
    if two_cores and M >= 2 * 256:
        # Keep >= 2 row tiles so the 'parallel' axis shards across both TCs,
        # without dropping below the ~256-row streaming floor.
        tm = max(256, min(tm, _round_up(pl.cdiv(M, 2), 16)))

    if tile_h is not None:
        th = tile_h
        assert hidden % th == 0, "tile_h must divide hidden_features"
    else:
        # Prefer nk = 1 (weights DMA'd once, kept resident) whenever the full
        # single-buffered weights plus activations fit comfortably in VMEM.
        if hidden % 128 != 0 or vmem_est(tm, hidden, 1) <= int(0.6 * vmem_cap):
            th = hidden
        else:
            # Hidden must be tiled: weights get re-streamed once per row tile,
            # so first raise tm to the generation-specific roofline target.
            if tile_m is None:
                tm = max(16, _round_up(min(tm_stream, M), 16))
                if two_cores and M >= 2 * 256:
                    tm = max(256, min(tm, _round_up(pl.cdiv(M, 2), 16)))
            budget_stream = int(0.55 * vmem_cap)
            th = None
            for d in range((hidden // 128) * 128, 127, -128):
                if hidden % d == 0 and vmem_est(tm, d, hidden // d) <= budget_stream:
                    th = d
                    break
            if th is None:
                th = 128  # smallest clean slab; vmem_limit clamp handles the rest
    nk = hidden // th

    use_scratch_acc = (nk > 1
                       and jnp.dtype(out_dtype) != jnp.dtype(jnp.float32))
    kernel = _make_kernel(nk > 1, use_scratch_acc, gelu_approx)
    scratch = ([pltpu.VMEM((tm, out_p), jnp.float32)] if use_scratch_acc else [])

    b1_2d = b1.reshape(1, hidden)
    b2_2d = b2p.reshape(1, out_p)

    grid = (pl.cdiv(M, tm), nk)
    n_row_tiles = grid[0]

    # ---------------- cost estimate ----------------
    flops = 2 * M * hidden * (in_f + out_p)
    w_bytes = ((w1.size + b1.size) + (w2p.size + b2p.size)) * w_isz
    w_reps = n_row_tiles if nk > 1 else 1      # weights re-fetched per row tile
    bytes_accessed = x2d.size * x_isz + w_bytes * w_reps + M * out_p * x_isz
    cost = pl.CostEstimate(flops=flops, transcendentals=M * hidden,
                           bytes_accessed=bytes_accessed)

    # ---------------- scoped VMEM limit ----------------
    if vmem_limit_bytes is None:
        est = vmem_est(tm, th, nk)
        if est > scoped_default:
            vmem_limit_bytes = min(int(est * 1.25), int(0.9 * vmem_cap))

    # ---------------- specs + call ----------------
    def _spec(shape, index_map, mode=None):
        if mode is None:
            return pl.BlockSpec(shape, index_map)
        return pl.BlockSpec(shape, index_map, pipeline_mode=mode)

    def _build(const_mode):
        # Single-buffering only for blocks whose index_map is grid-constant:
        # weights/b1 when hidden isn't tiled, b2 always.
        w_mode = const_mode if nk == 1 else None
        in_specs = [
            _spec((tm, in_f), lambda i, k: (i, 0)),
            _spec((in_f, th), lambda i, k: (0, k), w_mode),
            _spec((1, th), lambda i, k: (0, k), w_mode),
            _spec((th, out_p), lambda i, k: (k, 0), w_mode),
            _spec((1, out_p), lambda i, k: (0, 0), const_mode),
        ]
        return pl.pallas_call(
            kernel,
            out_shape=jax.ShapeDtypeStruct((M, out_p), out_dtype),
            grid_spec=pltpu.PrefetchScalarGridSpec(
                num_scalar_prefetch=0,
                grid=grid,
                in_specs=in_specs,
                out_specs=pl.BlockSpec((tm, out_p), lambda i, k: (i, 0)),
                scratch_shapes=scratch,
            ),
            compiler_params=pltpu.CompilerParams(
                dimension_semantics=("parallel", "arbitrary"),
                vmem_limit_bytes=vmem_limit_bytes,
            ),
            cost_estimate=cost,
        )(x2d, w1, b1_2d, w2p, b2_2d)

    const_mode = pl.Buffered(1) if hasattr(pl, "Buffered") else None
    try:
        out = _build(const_mode)
    except _BUFFERED_FALLBACK_ERRORS:
        if const_mode is None:
            raise
        out = _build(None)

    if out_p != out_f:
        out = out[:, :out_f]
    return out.reshape(*orig_shape[:-1], out_f)


# ----------------------------------------------------------------------------
# Parameter init + reference
# ----------------------------------------------------------------------------
def init_mlp_params(key, in_features, hidden_features, out_features,
                    dtype=jnp.float32):
    """torch.nn.Linear-style init.  Weights stored transposed vs torch, i.e.
       (in, out), so the kernel computes x @ W."""
    k1, k2, k3, k4 = jax.random.split(key, 4)
    bound1 = 1.0 / math.sqrt(in_features)
    bound2 = 1.0 / math.sqrt(hidden_features)
    w1 = jax.random.uniform(k1, (in_features, hidden_features), dtype,
                            minval=-bound1, maxval=bound1)
    b1 = jax.random.uniform(k2, (hidden_features,), dtype,
                            minval=-bound1, maxval=bound1)
    w2 = jax.random.uniform(k3, (hidden_features, out_features), dtype,
                            minval=-bound2, maxval=bound2)
    b2 = jax.random.uniform(k4, (out_features,), dtype,
                            minval=-bound2, maxval=bound2)
    return w1, b1, w2, b2


def mlp_reference(x, w1, b1, w2, b2):
    h = x @ w1 + b1
    h = 0.5 * h * (1.0 + jax.lax.erf(h / jnp.sqrt(2.0)))
    return h @ w2 + b2


if __name__ == "__main__":
    key = jax.random.PRNGKey(0)
    kx, kp, kp2 = jax.random.split(key, 3)

    # Small transformer-MLP-like shapes (lane-aligned): (B=2, N=8, C=128), hidden=256.
    B, N, C = 2, 8, 128
    hidden = 256
    out_c = C

    x = jax.random.normal(kx, (B, N, C), dtype=jnp.float32)
    w1, b1, w2, b2 = init_mlp_params(kp, C, hidden, out_c, dtype=jnp.float32)
    y_ref = mlp_reference(x, w1, b1, w2, b2)

    # 1) f32 path, single hidden block (weights resident, no accumulator).
    y = jax.block_until_ready(mlp_pallas(x, w1, b1, w2, b2))
    assert y.shape == (B, N, out_c)
    assert jnp.allclose(y, y_ref, atol=3e-5, rtol=3e-5), "f32 mismatch vs reference"

    # 2) hidden-tiled path with f32 output -> accumulate directly into o_ref.
    y_kt = jax.block_until_ready(mlp_pallas(x, w1, b1, w2, b2, tile_h=128))
    assert jnp.allclose(y_kt, y_ref, atol=3e-5, rtol=3e-5), "tiled-hidden mismatch"

    # 3) bf16 operands (native MXU dtype) with f32 accumulation; also exercise
    #    the hidden-tiled + f32-scratch-accumulator path for non-f32 output.
    xb = x.astype(jnp.bfloat16)
    w1b, b1b, w2b, b2b = (t.astype(jnp.bfloat16) for t in (w1, b1, w2, b2))
    yb_ref = mlp_reference(xb.astype(jnp.float32), w1b.astype(jnp.float32),
                           b1b.astype(jnp.float32), w2b.astype(jnp.float32),
                           b2b.astype(jnp.float32))
    yb = jax.block_until_ready(mlp_pallas(xb, w1b, b1b, w2b, b2b))
    assert jnp.allclose(yb.astype(jnp.float32), yb_ref, atol=1e-1, rtol=1e-1), \
        "bf16 mismatch vs reference"
    yb_kt = jax.block_until_ready(mlp_pallas(xb, w1b, b1b, w2b, b2b, tile_h=128))
    assert jnp.allclose(yb_kt.astype(jnp.float32), yb_ref, atol=1e-1, rtol=1e-1), \
        "bf16 tiled-hidden mismatch"

    # 4) ragged row count (no wrapper-side jnp.pad; Pallas masks the last block).
    x_r = jax.random.normal(kx, (2, 9, C), dtype=jnp.float32)
    y_r = jax.block_until_ready(mlp_pallas(x_r, w1, b1, w2, b2))
    assert jnp.allclose(y_r, mlp_reference(x_r, w1, b1, w2, b2),
                        atol=3e-5, rtol=3e-5), "ragged-M mismatch"

    # 5) sub-128 out_features -> lane-dense padding of W2/b2 + output slice.
    w1s, b1s, w2s, b2s = init_mlp_params(kp2, C, hidden, 64, dtype=jnp.float32)
    y_s = jax.block_until_ready(mlp_pallas(x, w1s, b1s, w2s, b2s))
    assert y_s.shape == (B, N, 64)
    assert jnp.allclose(y_s, mlp_reference(x, w1s, b1s, w2s, b2s),
                        atol=3e-5, rtol=3e-5), "narrow-out mismatch"

    # 6) optional tanh-approximate GELU (numerics-visible; looser tolerance).
    y_a = jax.block_until_ready(mlp_pallas(x, w1, b1, w2, b2, gelu_approx=True))
    assert jnp.allclose(y_a, y_ref, atol=5e-2, rtol=5e-2), "approx-GELU mismatch"

    print("KERNEL_OK")
</pallas_src>

<mosaic_0001>
module attributes {stable_mosaic.version = 11 : i64} {
  func.func @kernel(%arg0: i32, %arg1: i32, %arg2: memref<16x128xf32, #tpu.memory_space<vmem>>, %arg3: memref<128x256xf32, #tpu.memory_space<vmem>>, %arg4: memref<1x256xf32, #tpu.memory_space<vmem>>, %arg5: memref<256x128xf32, #tpu.memory_space<vmem>>, %arg6: memref<1x128xf32, #tpu.memory_space<vmem>>, %arg7: memref<16x128xf32, #tpu.memory_space<vmem>>) attributes {dimension_semantics = [#tpu.dimension_semantics<parallel>, #tpu.dimension_semantics<arbitrary>], iteration_bounds = array<i64: 1, 1>, scalar_prefetch = 0 : i64, scratch_operands = 0 : i64, tpu.core_type = #tpu.core_type<tc>, window_params = [{transform_indices = @transform_0, window_bounds = array<i64: 16, 128>}, {pipeline_mode = #tpu.pipeline_mode<synchronous>, transform_indices = @transform_1, window_bounds = array<i64: 128, 256>}, {pipeline_mode = #tpu.pipeline_mode<synchronous>, transform_indices = @transform_2, window_bounds = array<i64: 1, 256>}, {pipeline_mode = #tpu.pipeline_mode<synchronous>, transform_indices = @transform_3, window_bounds = array<i64: 256, 128>}, {pipeline_mode = #tpu.pipeline_mode<synchronous>, transform_indices = @transform_4, window_bounds = array<i64: 1, 128>}, {transform_indices = @transform_5, window_bounds = array<i64: 16, 128>}]} {
    %c0 = arith.constant 0 : index
    %c0_0 = arith.constant 0 : index
    %0 = vector.load %arg2[%c0, %c0_0] : memref<16x128xf32, #tpu.memory_space<vmem>>, vector<16x128xf32>
    %c0_1 = arith.constant 0 : index
    %c0_2 = arith.constant 0 : index
    %1 = vector.load %arg3[%c0_1, %c0_2] : memref<128x256xf32, #tpu.memory_space<vmem>>, vector<128x256xf32>
    %cst = arith.constant dense<0.000000e+00> : vector<16x256xf32>
    %2 = tpu.matmul %0, %1, %cst {dimension_numbers = #tpu.dot_dimension_numbers<[1], [0], [0], [1], [0, 0, 1, 1], [], []>} : vector<16x128xf32>, vector<128x256xf32>, vector<16x256xf32> -> vector<16x256xf32>
    %c0_3 = arith.constant 0 : index
    %c0_4 = arith.constant 0 : index
    %3 = vector.load %arg4[%c0_3, %c0_4] : memref<1x256xf32, #tpu.memory_space<vmem>>, vector<1x256xf32>
    %4 = vector.broadcast %3 : vector<1x256xf32> to vector<16x256xf32>
    %5 = arith.addf %2, %4 : vector<16x256xf32>
    %cst_5 = arith.constant 5.000000e-01 : f32
    %6 = vector.broadcast %cst_5 : f32 to vector<16x256xf32>
    %7 = arith.mulf %6, %5 : vector<16x256xf32>
    %cst_6 = arith.constant 0.707106769 : f32
    %8 = vector.broadcast %cst_6 : f32 to vector<16x256xf32>
    %9 = arith.mulf %5, %8 : vector<16x256xf32>
    %10 = math.erf %9 : vector<16x256xf32>
    %cst_7 = arith.constant 1.000000e+00 : f32
    %11 = vector.broadcast %cst_7 : f32 to vector<16x256xf32>
    %12 = arith.addf %11, %10 : vector<16x256xf32>
    %13 = arith.mulf %7, %12 : vector<16x256xf32>
    %c0_8 = arith.constant 0 : index
    %c0_9 = arith.constant 0 : index
    %14 = vector.load %arg5[%c0_8, %c0_9] : memref<256x128xf32, #tpu.memory_space<vmem>>, vector<256x128xf32>
    %cst_10 = arith.constant dense<0.000000e+00> : vector<16x128xf32>
    %15 = tpu.matmul %13, %14, %cst_10 {dimension_numbers = #tpu.dot_dimension_numbers<[1], [0], [0], [1], [0, 0, 1, 1], [], []>} : vector<16x256xf32>, vector<256x128xf32>, vector<16x128xf32> -> vector<16x128xf32>
    %c0_11 = arith.constant 0 : index
    %c0_12 = arith.constant 0 : index
    %16 = vector.load %arg6[%c0_11, %c0_12] : memref<1x128xf32, #tpu.memory_space<vmem>>, vector<1x128xf32>
    %17 = vector.broadcast %16 : vector<1x128xf32> to vector<16x128xf32>
    %18 = arith.addf %15, %17 : vector<16x128xf32>
    %c0_13 = arith.constant 0 : index
    %c0_14 = arith.constant 0 : index
    %19 = vector.load %arg7[%c0_13, %c0_14] : memref<16x128xf32, #tpu.memory_space<vmem>>, vector<16x128xf32>
    tpu.vector_store %arg7[%c0_13, %c0_14], %18 {strides = array<i32>} : memref<16x128xf32, #tpu.memory_space<vmem>>, vector<16x128xf32>,
    return
  }
  func.func @transform_0(%arg0: i32, %arg1: i32) -> (i32, i32) {
    %c0_i32 = arith.constant 0 : i32
    %c0_i32_0 = arith.constant 0 : i32
    return %arg0, %c0_i32 : i32, i32
  }
  func.func @transform_1(%arg0: i32, %arg1: i32) -> (i32, i32) {
    %c0_i32 = arith.constant 0 : i32
    %c0_i32_0 = arith.constant 0 : i32
    return %c0_i32, %arg1 : i32, i32
  }
  func.func @transform_2(%arg0: i32, %arg1: i32) -> (i32, i32) {
    %c0_i32 = arith.constant 0 : i32
    %c0_i32_0 = arith.constant 0 : i32
    return %c0_i32, %arg1 : i32, i32
  }
  func.func @transform_3(%arg0: i32, %arg1: i32) -> (i32, i32) {
    %c0_i32 = arith.constant 0 : i32
    %c0_i32_0 = arith.constant 0 : i32
    return %arg1, %c0_i32 : i32, i32
  }
  func.func @transform_4(%arg0: i32, %arg1: i32) -> (i32, i32) {
    %c0_i32 = arith.constant 0 : i32
    %c0_i32_0 = arith.constant 0 : i32
    %c0_i32_1 = arith.constant 0 : i32
    return %c0_i32, %c0_i32_0 : i32, i32
  }
  func.func @transform_5(%arg0: i32, %arg1: i32) -> (i32, i32) {
    %c0_i32 = arith.constant 0 : i32
    %c0_i32_0 = arith.constant 0 : i32
    return %arg0, %c0_i32 : i32, i32
  }
}

</mosaic_0001>

<llo_original>
// kernel: tpu_custom_call.1
$region0: #{tpu_custom_call.1}
  #allocation0 [shape = 'u32[]', space=smem, size = 0x4, offset = 0x4, fixed_abs, tag = 'smem constant byte address 0x4 - core index']
  #allocation1 [shape = 'u32[72,128]{1,0:T(1,128)}', space=vmem, size = 0x9000, scoped, tag = 'internal scratch']
  %s0 = inlined_call_operand.hbm [shape: f32[16,128], index: 0, kind: input, shape index: {}]
  %s1 = inlined_call_operand.hbm [shape: f32[128,256], index: 1, kind: input, shape index: {}]
  %s2 = inlined_call_operand.hbm [shape: f32[1,256], index: 2, kind: input, shape index: {}]
  %s3 = inlined_call_operand.hbm [shape: f32[256,128], index: 3, kind: input, shape index: {}]
  %s4 = inlined_call_operand.vmem [shape: f32[1,128], index: 4, kind: input, shape index: {}]
  %s5 = inlined_call_operand.hbm [shape: f32[16,128], index: 5, kind: output, shape index: {}]
  %s6 = sld [smem:[#allocation0]]
  $region46: #{tpu_custom_call.1} parent=0
    _
  %s8 = ssub.s32 1, %s6
  %s9 = scalar_select 0, %s8, %s6
  $region1: #{tpu_custom_call.1} parent=0
    #allocation2 [shape = 'u8[8192]{0}', space=vmem, size = 0x2000, scoped, tag = 'input window, operand 0, single buffered']
    #allocation3 [shape = 's32[1]{0}', space=sflag, size = 0x4, scoped, tag = 'scoped memory for tpu_custom_call.1']
    #allocation4 [shape = 's32[1]{0}', space=sflag, size = 0x4, scoped, tag = 'scoped memory for tpu_custom_call.1']
    #allocation5 [shape = 'u8[131072]{0}', space=vmem, size = 0x20000, scoped, tag = 'input window, operand 1, single buffered']
    #allocation6 [shape = 's32[1]{0}', space=sflag, size = 0x4, scoped, tag = 'scoped memory for tpu_custom_call.1']
    #allocation7 [shape = 'u8[1024]{0}', space=vmem, size = 0x400, scoped, tag = 'input window, operand 2, single buffered']
    #allocation8 [shape = 'u8[131072]{0}', space=vmem, size = 0x20000, scoped, tag = 'input window, operand 3, single buffered']
    #allocation9 [shape = 's32[1]{0}', space=sflag, size = 0x4, scoped, tag = 'scoped memory for tpu_custom_call.1']
    #allocation10 [shape = 'u8[8192]{0}', space=vmem, size = 0x2000, scoped, tag = 'output window, operand 0, single buffered']
    %10 = vsyncpa [#allocation3], 0
    %11 = vsyncpa [#allocation6], 0
    %12 = vsyncpa [#allocation9], 0
    %13 = vsyncpa [#allocation4], 0
    // Predicated region
    $region2: #{tpu_custom_call.1} parent=1 // pred_check
      _
    $region3: #{tpu_custom_call.1} parent=1 // pred_check_branch
      %15 = sbr.rel (0) target = $region5
    $region4: #{tpu_custom_call.1} parent=1 // pred_region
      %17 = vsyncadd [#allocation3], 0
      %s18 = sshll.u32 %s0, 4
      %s19 = int_to_ptr.hbm [resolvable:$true] %s18
      %s20 = sshll.u32 [#allocation2], 4
      %s21 = int_to_ptr.vmem [resolvable:$true] %s20
      %26 = dma.hbm_to_vmem [thread:$0]  %s19, 256, %s21, [#allocation3], 128, 128, 8
    $region5: #{tpu_custom_call.1} parent=1 // pred_fallthru
      _
    // Predicated region
    $region6: #{tpu_custom_call.1} parent=1 // pred_check
      _
    $region7: #{tpu_custom_call.1} parent=1 // pred_check_branch
      %28 = sbr.rel (0) target = $region9
    $region8: #{tpu_custom_call.1} parent=1 // pred_region
      %30 = vsyncadd [#allocation6], 0
      %s31 = sshll.u32 %s1, 4
      %s32 = int_to_ptr.hbm [resolvable:$true] %s31
      %s33 = sshll.u32 [#allocation5], 4
      %s34 = int_to_ptr.vmem [resolvable:$true] %s33
      %39 = dma.hbm_to_vmem [thread:$0]  %s32, 4096, %s34, [#allocation6], 256, 256, 16
    $region9: #{tpu_custom_call.1} parent=1 // pred_fallthru
      _
    // Predicated region
    $region10: #{tpu_custom_call.1} parent=1 // pred_check
      _
    $region11: #{tpu_custom_call.1} parent=1 // pred_check_branch
      %41 = sbr.rel (0) target = $region13
    $region12: #{tpu_custom_call.1} parent=1 // pred_region
      %43 = vsyncadd [#allocation6], 0
      %s45 = sshll.u32 %s2, 4
      %s46 = int_to_ptr.hbm [resolvable:$true] %s45
      %s47 = sshll.u32 [#allocation7], 4
      %s48 = int_to_ptr.vmem [resolvable:$true] %s47
      %50 = dma.hbm_to_vmem [thread:$0]  %s46, 32, %s48, [#allocation6]
    $region13: #{tpu_custom_call.1} parent=1 // pred_fallthru
      _
    // Predicated region
    $region14: #{tpu_custom_call.1} parent=1 // pred_check
      _
    $region15: #{tpu_custom_call.1} parent=1 // pred_check_branch
      %52 = sbr.rel (0) target = $region17
    $region16: #{tpu_custom_call.1} parent=1 // pred_region
      %54 = vsyncadd [#allocation9], 0
      %s55 = sshll.u32 %s3, 4
      %s56 = int_to_ptr.hbm [resolvable:$true] %s55
      %s57 = sshll.u32 [#allocation8], 4
      %s58 = int_to_ptr.vmem [resolvable:$true] %s57
      %63 = dma.hbm_to_vmem [thread:$0]  %s56, 4096, %s58, [#allocation9], 128, 128, 8
    $region17: #{tpu_custom_call.1} parent=1 // pred_fallthru
      _
    // Predicated region
    $region18: #{tpu_custom_call.1} parent=1 // pred_check
      _
    $region19: #{tpu_custom_call.1} parent=1 // pred_check_branch
      %65 = sbr.rel (0) target = $region21
    $region20: #{tpu_custom_call.1} parent=1 // pred_region
      _
    $region21: #{tpu_custom_call.1} parent=1 // pred_fallthru
      _
    // Predicated region
    $region22: #{tpu_custom_call.1} parent=1 // pred_check
      _
    $region23: #{tpu_custom_call.1} parent=1 // pred_check_branch
      %67 = sbr.rel (0) target = $region25
    $region24: #{tpu_custom_call.1} parent=1 // pred_region
      %69 = dma.done [#allocation3], 256
    $region25: #{tpu_custom_call.1} parent=1 // pred_fallthru
      _
    // Predicated region
    $region26: #{tpu_custom_call.1} parent=1 // pred_check
      _
    $region27: #{tpu_custom_call.1} parent=1 // pred_check_branch
      %71 = sbr.rel (0) target = $region29
    $region28: #{tpu_custom_call.1} parent=1 // pred_region
      %73 = dma.done [#allocation6], 4096
    $region29: #{tpu_custom_call.1} parent=1 // pred_fallthru
      _
    // Predicated region
    $region30: #{tpu_custom_call.1} parent=1 // pred_check
      _
    $region31: #{tpu_custom_call.1} parent=1 // pred_check_branch
      %75 = sbr.rel (0) target = $region33
    $region32: #{tpu_custom_call.1} parent=1 // pred_region
      %77 = dma.done [#allocation6], 32
    $region33: #{tpu_custom_call.1} parent=1 // pred_fallthru
      _
    // Predicated region
    $region34: #{tpu_custom_call.1} parent=1 // pred_check
      _
    $region35: #{tpu_custom_call.1} parent=1 // pred_check_branch
      %79 = sbr.rel (0) target = $region37
    $region36: #{tpu_custom_call.1} parent=1 // pred_region
      %81 = dma.done [#allocation9], 4096
    $region37: #{tpu_custom_call.1} parent=1 // pred_fallthru
      _
    %v82 = vld [vmem:[#allocation2] sm:$0xff]
    %v83 = vld [vmem:[#allocation2 + $0x8] sm:$0xff]
    %v84 = vld [vmem:[#allocation5] sm:$0xff]
    %v85 = vld [vmem:[#allocation5 + $0x8] sm:$0xff]
    %v86 = vld [vmem:[#allocation5 + $0x10] sm:$0xff]
    %v87 = vld [vmem:[#allocation5 + $0x18] sm:$0xff]
    %v88 = vld [vmem:[#allocation5 + $0x20] sm:$0xff]
    %v89 = vld [vmem:[#allocation5 + $0x28] sm:$0xff]
    %v90 = vld [vmem:[#allocation5 + $0x30] sm:$0xff]
    %v91 = vld [vmem:[#allocation5 + $0x38] sm:$0xff]
    %v92 = vld [vmem:[#allocation5 + $0x40] sm:$0xff]
    %v93 = vld [vmem:[#allocation5 + $0x48] sm:$0xff]
    %v94 = vld [vmem:[#allocation5 + $0x50] sm:$0xff]
    %v95 = vld [vmem:[#allocation5 + $0x58] sm:$0xff]
    %v96 = vld [vmem:[#allocation5 + $0x60] sm:$0xff]
    %v97 = vld [vmem:[#allocation5 + $0x68] sm:$0xff]
    %v98 = vld [vmem:[#allocation5 + $0x70] sm:$0xff]
    %v99 = vld [vmem:[#allocation5 + $0x78] sm:$0xff]
    %v100 = vld [vmem:[#allocation5 + $0x80] sm:$0xff]
    %v101 = vld [vmem:[#allocation5 + $0x88] sm:$0xff]
    %v102 = vld [vmem:[#allocation5 + $0x90] sm:$0xff]
    %v103 = vld [vmem:[#allocation5 + $0x98] sm:$0xff]
    %v104 = vld [vmem:[#allocation5 + $0xa0] sm:$0xff]
    %v105 = vld [vmem:[#allocation5 + $0xa8] sm:$0xff]
    %v106 = vld [vmem:[#allocation5 + $0xb0] sm:$0xff]
    %v107 = vld [vmem:[#allocation5 + $0xb8] sm:$0xff]
    %v108 = vld [vmem:[#allocation5 + $0xc0] sm:$0xff]
    %v109 = vld [vmem:[#allocation5 + $0xc8] sm:$0xff]
    %v110 = vld [vmem:[#allocation5 + $0xd0] sm:$0xff]
    %v111 = vld [vmem:[#allocation5 + $0xd8] sm:$0xff]
    %v112 = vld [vmem:[#allocation5 + $0xe0] sm:$0xff]
    %v113 = vld [vmem:[#allocation5 + $0xe8] sm:$0xff]
    %v114 = vld [vmem:[#allocation5 + $0xf0] sm:$0xff]
    %v115 = vld [vmem:[#allocation5 + $0xf8] sm:$0xff]
    %v116 = vld [vmem:[#allocation7] sm:$0x3]
    %v118 = vperm.slane %v116, 0
    %v119 = vperm.slane %v116, 1
    %122 = vmatpush.msra.mxu0 %v114
    %123 = vmatpush.msra.mxu0 %v112
    %124 = vmatpush.msra.mxu0 %v110
    %125 = vmatpush.msra.mxu0 %v108
    %126 = vmatpush.msra.mxu0 %v106
    %127 = vmatpush.msra.mxu0 %v104
    %128 = vmatpush.msra.mxu0 %v102
    %129 = vmatpush.msra.mxu0 %v100
    %130 = vmatpush.msra.mxu0 %v98
    %131 = vmatpush.msra.mxu0 %v96
    %132 = vmatpush.msra.mxu0 %v94
    %133 = vmatpush.msra.mxu0 %v92
    %134 = vmatpush.msra.mxu0 %v90
    %135 = vmatpush.msra.mxu0 %v88
    %136 = vmatpush.msra.mxu0 %v86
    %137 = vmatpush.msra.mxu0 %v84
    %138 = vmatmul.f32.gmra.mxu0 %v82
    %v139 = vpop.f32.mrf.mxu0
    %v140 = vadd.f32 %v118, %v139
    %141 = vmatmul.f32.gmra.mxu0 %v83
    %v142 = vpop.f32.mrf.mxu0
    %v143 = vadd.f32 %v118, %v142
    %144 = vdwg.mxu0
    %145 = vmatpush.msra.mxu0 %v115
    %146 = vmatpush.msra.mxu0 %v113
    %147 = vmatpush.msra.mxu0 %v111
    %148 = vmatpush.msra.mxu0 %v109
    %149 = vmatpush.msra.mxu0 %v107
    %150 = vmatpush.msra.mxu0 %v105
    %151 = vmatpush.msra.mxu0 %v103
    %152 = vmatpush.msra.mxu0 %v101
    %153 = vmatpush.msra.mxu0 %v99
    %154 = vmatpush.msra.mxu0 %v97
    %155 = vmatpush.msra.mxu0 %v95
    %156 = vmatpush.msra.mxu0 %v93
    %157 = vmatpush.msra.mxu0 %v91
    %158 = vmatpush.msra.mxu0 %v89
    %159 = vmatpush.msra.mxu0 %v87
    %160 = vmatpush.msra.mxu0 %v85
    %161 = vmatmul.f32.gmra.mxu0 %v82
    %v162 = vpop.f32.mrf.mxu0
    %v163 = vadd.f32 %v119, %v162
    %164 = vmatmul.f32.gmra.mxu0 %v83
    %v165 = vpop.f32.mrf.mxu0
    %v166 = vadd.f32 %v119, %v165
    %167 = vdwg.mxu0
    %v168 = vmul.f32 %v140, 0.5
    %v169 = vmul.f32 %v163, 0.5
    %v170 = vmul.f32 %v143, 0.5
    %v171 = vmul.f32 %v166, 0.5
    %v172 = vmul.f32 %v140, 0.70710677
    %v173 = vmul.f32 %v163, 0.70710677
    %v174 = vmul.f32 %v143, 0.70710677
    %v175 = vmul.f32 %v166, 0.70710677
    %v176 = vmul.f32 %v172, %v172
    %v177 = vmin.f32 16.0, %v176
    %v178 = vmul.f32 %v177, 2.1237322e-06
    %v179 = vadd.f32 %v178, 0.00028619796
    %v180 = vmul.f32 %v177, %v179
    %v181 = vadd.f32 %v180, 0.0036580483
    %v182 = vmul.f32 %v177, %v181
    %v183 = vadd.f32 %v182, 0.05243302
    %v184 = vmul.f32 %v177, %v183
    %v185 = vadd.f32 %v184, 0.18741608
    %v186 = vmul.f32 %v177, %v185
    %v187 = vadd.f32 %v186, 1.1283791
    %v188 = vmul.f32 %v172, %v187
    %v189 = vmul.f32 %v177, 3.8918573e-05
    %v190 = vadd.f32 %v189, 0.001143296
    %v191 = vmul.f32 %v177, %v190
    %v192 = vadd.f32 %v191, 0.014752088
    %v193 = vmul.f32 %v177, %v192
    %v194 = vadd.f32 %v193, 0.112945676
    %v195 = vmul.f32 %v177, %v194
    %v196 = vadd.f32 %v195, 0.4994258
    %v197 = vmul.f32 %v177, %v196
    %v198 = vadd.f32 %v197, 1.0
    %v199 = vrcp.pop %v198
    %v200 = vmul.f32 %v198, %v199
    %v201 = vsub.f32 1.0, %v200
    %v202 = vmul.f32 %v199, %v201
    %v203 = vadd.f32 %v199, %v202
    %vm204 = vweird.f32 %v198
    %vm205 = vweird.f32 %v199
    %vm206 = vmor %vm204, %vm205
    %v207 = vsel %vm206, %v199, %v203
    %v208 = vand.u32 2147483647, %v198
    %vm209 = vcmp.eq.f32.partialorder %v208, 8.507059e+37
    %v210 = vand.u32 %v198, 2147483648
    %v211 = vor.u32 1.1754944e-38, %v210
    %v212 = vsel %vm209, %v211, %v207
    %v213 = vmul.f32 %v188, %v212
    %v214 = vmin.f32 %v213, 1.0
    %v215 = vmax.f32 %v214, -1.0
    %v216 = vmul.f32 %v173, %v173
    %v217 = vmin.f32 16.0, %v216
    %v218 = vmul.f32 %v217, 2.1237322e-06
    %v219 = vadd.f32 %v218, 0.00028619796
    %v220 = vmul.f32 %v217, %v219
    %v221 = vadd.f32 %v220, 0.0036580483
    %v222 = vmul.f32 %v217, %v221
    %v223 = vadd.f32 %v222, 0.05243302
    %v224 = vmul.f32 %v217, %v223
    %v225 = vadd.f32 %v224, 0.18741608
    %v226 = vmul.f32 %v217, %v225
    %v227 = vadd.f32 %v226, 1.1283791
    %v228 = vmul.f32 %v173, %v227
    %v229 = vmul.f32 %v217, 3.8918573e-05
    %v230 = vadd.f32 %v229, 0.001143296
    %v231 = vmul.f32 %v217, %v230
    %v232 = vadd.f32 %v231, 0.014752088
    %v233 = vmul.f32 %v217, %v232
    %v234 = vadd.f32 %v233, 0.112945676
    %v235 = vmul.f32 %v217, %v234
    %v236 = vadd.f32 %v235, 0.4994258
    %v237 = vmul.f32 %v217, %v236
    %v238 = vadd.f32 %v237, 1.0
    %v239 = vrcp.pop %v238
    %v240 = vmul.f32 %v238, %v239
    %v241 = vsub.f32 1.0, %v240
    %v242 = vmul.f32 %v239, %v241
    %v243 = vadd.f32 %v239, %v242
    %vm244 = vweird.f32 %v238
    %vm245 = vweird.f32 %v239
    %vm246 = vmor %vm244, %vm245
    %v247 = vsel %vm246, %v239, %v243
    %v248 = vand.u32 2147483647, %v238
    %vm249 = vcmp.eq.f32.partialorder %v248, 8.507059e+37
    %v250 = vand.u32 %v238, 2147483648
    %v251 = vor.u32 1.1754944e-38, %v250
    %v252 = vsel %vm249, %v251, %v247
    %v253 = vmul.f32 %v228, %v252
    %v254 = vmin.f32 %v253, 1.0
    %v255 = vmax.f32 %v254, -1.0
    %v256 = vmul.f32 %v174, %v174
    %v257 = vmin.f32 16.0, %v256
    %v258 = vmul.f32 %v257, 2.1237322e-06
    %v259 = vadd.f32 %v258, 0.00028619796
    %v260 = vmul.f32 %v257, %v259
    %v261 = vadd.f32 %v260, 0.0036580483
    %v262 = vmul.f32 %v257, %v261
    %v263 = vadd.f32 %v262, 0.05243302
    %v264 = vmul.f32 %v257, %v263
    %v265 = vadd.f32 %v264, 0.18741608
    %v266 = vmul.f32 %v257, %v265
    %v267 = vadd.f32 %v266, 1.1283791
    %v268 = vmul.f32 %v174, %v267
    %v269 = vmul.f32 %v257, 3.8918573e-05
    %v270 = vadd.f32 %v269, 0.001143296
    %v271 = vmul.f32 %v257, %v270
    %v272 = vadd.f32 %v271, 0.014752088
    %v273 = vmul.f32 %v257, %v272
    %v274 = vadd.f32 %v273, 0.112945676
    %v275 = vmul.f32 %v257, %v274
    %v276 = vadd.f32 %v275, 0.4994258
    %v277 = vmul.f32 %v257, %v276
    %v278 = vadd.f32 %v277, 1.0
    %v279 = vrcp.pop %v278
    %v280 = vmul.f32 %v278, %v279
    %v281 = vsub.f32 1.0, %v280
    %v282 = vmul.f32 %v279, %v281
    %v283 = vadd.f32 %v279, %v282
    %vm284 = vweird.f32 %v278
    %vm285 = vweird.f32 %v279
    %vm286 = vmor %vm284, %vm285
    %v287 = vsel %vm286, %v279, %v283
    %v288 = vand.u32 2147483647, %v278
    %vm289 = vcmp.eq.f32.partialorder %v288, 8.507059e+37
    %v290 = vand.u32 %v278, 2147483648
    %v291 = vor.u32 1.1754944e-38, %v290
    %v292 = vsel %vm289, %v291, %v287
    %v293 = vmul.f32 %v268, %v292
    %v294 = vmin.f32 %v293, 1.0
    %v295 = vmax.f32 %v294, -1.0
    %v296 = vmul.f32 %v175, %v175
    %v297 = vmin.f32 16.0, %v296
    %v298 = vmul.f32 %v297, 2.1237322e-06
    %v299 = vadd.f32 %v298, 0.00028619796
    %v300 = vmul.f32 %v297, %v299
    %v301 = vadd.f32 %v300, 0.0036580483
    %v302 = vmul.f32 %v297, %v301
    %v303 = vadd.f32 %v302, 0.05243302
    %v304 = vmul.f32 %v297, %v303
    %v305 = vadd.f32 %v304, 0.18741608
    %v306 = vmul.f32 %v297, %v305
    %v307 = vadd.f32 %v306, 1.1283791
    %v308 = vmul.f32 %v175, %v307
    %v309 = vmul.f32 %v297, 3.8918573e-05
    %v310 = vadd.f32 %v309, 0.001143296
    %v311 = vmul.f32 %v297, %v310
    %v312 = vadd.f32 %v311, 0.014752088
    %v313 = vmul.f32 %v297, %v312
    %v314 = vadd.f32 %v313, 0.112945676
    %v315 = vmul.f32 %v297, %v314
    %v316 = vadd.f32 %v315, 0.4994258
    %v317 = vmul.f32 %v297, %v316
    %v318 = vadd.f32 %v317, 1.0
    %v319 = vrcp.pop %v318
    %v320 = vmul.f32 %v318, %v319
    %v321 = vsub.f32 1.0, %v320
    %v322 = vmul.f32 %v319, %v321
    %v323 = vadd.f32 %v319, %v322
    %vm324 = vweird.f32 %v318
    %vm325 = vweird.f32 %v319
    %vm326 = vmor %vm324, %vm325
    %v327 = vsel %vm326, %v319, %v323
    %v328 = vand.u32 2147483647, %v318
    %vm329 = vcmp.eq.f32.partialorder %v328, 8.507059e+37
    %v330 = vand.u32 %v318, 2147483648
    %v331 = vor.u32 1.1754944e-38, %v330
    %v332 = vsel %vm329, %v331, %v327
    %v333 = vmul.f32 %v308, %v332
    %v334 = vmin.f32 %v333, 1.0
    %v335 = vmax.f32 %v334, -1.0
    %v336 = vadd.f32 %v215, 1.0
    %v337 = vadd.f32 %v255, 1.0
    %v338 = vadd.f32 %v295, 1.0
    %v339 = vadd.f32 %v335, 1.0
    %v340 = vmul.f32 %v168, %v336
    %v341 = vmul.f32 %v169, %v337
    %v342 = vmul.f32 %v170, %v338
    %v343 = vmul.f32 %v171, %v339
    %v344 = vld [vmem:[#allocation8] sm:$0xff]
    %v345 = vld [vmem:[#allocation8 + $0x8] sm:$0xff]
    %v346 = vld [vmem:[#allocation8 + $0x10] sm:$0xff]
    %v347 = vld [vmem:[#allocation8 + $0x18] sm:$0xff]
    %v348 = vld [vmem:[#allocation8 + $0x20] sm:$0xff]
    %v349 = vld [vmem:[#allocation8 + $0x28] sm:$0xff]
    %v350 = vld [vmem:[#allocation8 + $0x30] sm:$0xff]
    %v351 = vld [vmem:[#allocation8 + $0x38] sm:$0xff]
    %v352 = vld [vmem:[#allocation8 + $0x40] sm:$0xff]
    %v353 = vld [vmem:[#allocation8 + $0x48] sm:$0xff]
    %v354 = vld [vmem:[#allocation8 + $0x50] sm:$0xff]
    %v355 = vld [vmem:[#allocation8 + $0x58] sm:$0xff]
    %v356 = vld [vmem:[#allocation8 + $0x60] sm:$0xff]
    %v357 = vld [vmem:[#allocation8 + $0x68] sm:$0xff]
    %v358 = vld [vmem:[#allocation8 + $0x70] sm:$0xff]
    %v359 = vld [vmem:[#allocation8 + $0x78] sm:$0xff]
    %v360 = vld [vmem:[#allocation8 + $0x80] sm:$0xff]
    %v361 = vld [vmem:[#allocation8 + $0x88] sm:$0xff]
    %v362 = vld [vmem:[#allocation8 + $0x90] sm:$0xff]
    %v363 = vld [vmem:[#allocation8 + $0x98] sm:$0xff]
    %v364 = vld [vmem:[#allocation8 + $0xa0] sm:$0xff]
    %v365 = vld [vmem:[#allocation8 + $0xa8] sm:$0xff]
    %v366 = vld [vmem:[#allocation8 + $0xb0] sm:$0xff]
    %v367 = vld [vmem:[#allocation8 + $0xb8] sm:$0xff]
    %v368 = vld [vmem:[#allocation8 + $0xc0] sm:$0xff]
    %v369 = vld [vmem:[#allocation8 + $0xc8] sm:$0xff]
    %v370 = vld [vmem:[#allocation8 + $0xd0] sm:$0xff]
    %v371 = vld [vmem:[#allocation8 + $0xd8] sm:$0xff]
    %v372 = vld [vmem:[#allocation8 + $0xe0] sm:$0xff]
    %v373 = vld [vmem:[#allocation8 + $0xe8] sm:$0xff]
    %v374 = vld [vmem:[#allocation8 + $0xf0] sm:$0xff]
    %v375 = vld [vmem:[#allocation8 + $0xf8] sm:$0xff]
    %v376 = vld [vmem:[%s4] sm:$0x1]
    %v378 = vperm.slane %v376, 0
    %380 = vmatpush.msra.mxu0 %v359
    %381 = vmatpush.msra.mxu0 %v358
    %382 = vmatpush.msra.mxu0 %v357
    %383 = vmatpush.msra.mxu0 %v356
    %384 = vmatpush.msra.mxu0 %v355
    %385 = vmatpush.msra.mxu0 %v354
    %386 = vmatpush.msra.mxu0 %v353
    %387 = vmatpush.msra.mxu0 %v352
    %388 = vmatpush.msra.mxu0 %v351
    %389 = vmatpush.msra.mxu0 %v350
    %390 = vmatpush.msra.mxu0 %v349
    %391 = vmatpush.msra.mxu0 %v348
    %392 = vmatpush.msra.mxu0 %v347
    %393 = vmatpush.msra.mxu0 %v346
    %394 = vmatpush.msra.mxu0 %v345
    %395 = vmatpush.msra.mxu0 %v344
    %396 = vmatmul.f32.gmra.mxu0 %v340
    %v397 = vpop.f32.mrf.mxu0
    %v398 = vadd.f32 %v378, %v397
    %399 = vmatmul.f32.gmra.mxu0 %v342
    %v400 = vpop.f32.mrf.mxu0
    %v401 = vadd.f32 %v378, %v400
    %402 = vdwg.mxu0
    %403 = vmatpush.msra.mxu0 %v375
    %404 = vmatpush.msra.mxu0 %v374
    %405 = vmatpush.msra.mxu0 %v373
    %406 = vmatpush.msra.mxu0 %v372
    %407 = vmatpush.msra.mxu0 %v371
    %408 = vmatpush.msra.mxu0 %v370
    %409 = vmatpush.msra.mxu0 %v369
    %410 = vmatpush.msra.mxu0 %v368
    %411 = vmatpush.msra.mxu0 %v367
    %412 = vmatpush.msra.mxu0 %v366
    %413 = vmatpush.msra.mxu0 %v365
    %414 = vmatpush.msra.mxu0 %v364
    %415 = vmatpush.msra.mxu0 %v363
    %416 = vmatpush.msra.mxu0 %v362
    %417 = vmatpush.msra.mxu0 %v361
    %418 = vmatpush.msra.mxu0 %v360
    %419 = vmatmul.f32.gmra.mxu0 %v341
    %v420 = vpop.f32.mrf.mxu0
    %v421 = vadd.f32 %v398, %v420
    %422 = vmatmul.f32.gmra.mxu0 %v343
    %v423 = vpop.f32.mrf.mxu0
    %v424 = vadd.f32 %v401, %v423
    %425 = vdwg.mxu0
    %426 = vst [vmem:[#allocation10] sm:$0xff] %v421
    %427 = vst [vmem:[#allocation10 + $0x8] sm:$0xff] %v424
    // Predicated region
    $region38: #{tpu_custom_call.1} parent=1 // pred_check
      _
    $region39: #{tpu_custom_call.1} parent=1 // pred_check_branch
      %429 = sbr.rel (0) target = $region41
    $region40: #{tpu_custom_call.1} parent=1 // pred_region
      %431 = vsyncadd [#allocation4], 0
      %s432 = sshll.u32 [#allocation10], 4
      %s433 = int_to_ptr.vmem [resolvable:$true] %s432
      %s434 = sshll.u32 %s5, 4
      %s435 = int_to_ptr.hbm [resolvable:$true] %s434
      %440 = dma.vmem_to_hbm [thread:$0]  %s433, 256, %s435, [#allocation4], 128, 128, 8
    $region41: #{tpu_custom_call.1} parent=1 // pred_fallthru
      _
    // Predicated region
    $region42: #{tpu_custom_call.1} parent=1 // pred_check
      _
    $region43: #{tpu_custom_call.1} parent=1 // pred_check_branch
      %442 = sbr.rel (0) target = $region45
    $region44: #{tpu_custom_call.1} parent=1 // pred_region
      %444 = dma.done [#allocation4], 256
    $region45: #{tpu_custom_call.1} parent=1 // pred_fallthru
      _
    %445 = vsyncpa [#allocation3], 1
    %446 = vsyncpa [#allocation6], 1
    %447 = vsyncpa [#allocation9], 1
    %448 = vsyncpa [#allocation4], 1

</llo_original>
